<compile_context>
chip_gen: v7x
topology: tpu7x:2x2x1
jax: 0.10.0
libtpu: 0.0.40
codegen_flags: <defaults>
</compile_context>

<pallas_src>
import functools

import jax
import jax.numpy as jnp
from jax.experimental import pallas as pl
from jax.experimental.pallas import tpu as pltpu


# ----------------------------------------------------------------------------
# Kernel
# ----------------------------------------------------------------------------
def _qwen2_mlp_kernel(x_ref, gu_ref, dw_ref, o_ref, acc_ref, *, ti):
    """Grid point (i, j): M tile i ("parallel"), intermediate tile j (reduction)."""
    j = pl.program_id(1)

    @pl.when(j == 0)
    def _():
        acc_ref[...] = jnp.zeros_like(acc_ref)

    x = x_ref[...]                                        # (tm, H)
    # Fused gate|up projection.  gu_ref holds [gate tile; up tile] as
    # (2*tI, H) rows; contract over H (x @ W.T, nn.Linear semantics) with a
    # single MXU dot of N = 2*tI.
    gu = jax.lax.dot_general(
        x, gu_ref[...],
        dimension_numbers=(((1,), (1,)), ((), ())),
        preferred_element_type=jnp.float32)               # (tm, 2*tI) f32
    gate = gu[:, :ti]
    up = gu[:, ti:]
    # SiLU gating (Qwen2 hidden_act).  Elementwise over I, so tiling I and
    # accumulating partial down-proj contributions is mathematically exact.
    hidden = (gate * jax.nn.sigmoid(gate)) * up           # (tm, tI) f32
    acc_ref[...] += jnp.dot(hidden.astype(dw_ref.dtype), dw_ref[...],
                            preferred_element_type=jnp.float32)   # (tm, H)

    @pl.when(j == pl.num_programs(1) - 1)
    def _():
        o_ref[...] = acc_ref[...].astype(o_ref.dtype)


# ----------------------------------------------------------------------------
# Trace-time tile selection helpers (all static Python)
# ----------------------------------------------------------------------------
def _cdiv(a, b):
    return (a + b - 1) // b


def _round_up(x, m):
    return _cdiv(x, m) * m


def _vmem_capacity_bytes():
    """Physical VMEM per TensorCore, generation-aware, with safe fallbacks."""
    try:
        cap = getattr(pltpu.get_tpu_info(), "vmem_capacity_bytes", None)
        if cap:
            return int(cap)
    except Exception:
        pass
    try:
        kind = jax.devices()[0].device_kind.lower()
    except Exception:
        kind = ""
    return (64 << 20) if "v7" in kind else (128 << 20)


def _vmem_estimate(tm, H, ti, w_bytes, x_bytes):
    """Conservative per-step VMEM footprint (bytes), including intermediates."""
    blocks = (tm * H * x_bytes          # x tile
              + 2 * ti * H * w_bytes    # fused gate|up weight tile
              + ti * H * w_bytes        # down weight tile
              + tm * H * x_bytes)       # output tile
    pipelined = 2 * blocks              # double-buffered by the pipeline
    # Compiler-managed f32 intermediates: gu result / gate / up / hidden
    # (tm, tI) tiles plus the (tm, H) down-proj dot result before the `+=`.
    intermediates = 4 * tm * ti * 4 + tm * H * 4
    acc = tm * H * 4                    # persistent f32 accumulator scratch
    internal = 4 << 20                  # Mosaic internal scratch headroom
    return pipelined + intermediates + acc + internal


def _pick_ti(I, H, tm, w_bytes, x_bytes, ti_target, budget):
    """Largest useful 128-multiple tI <= ti_target that fits the VMEM budget.

    tI does not need to divide I (the weight I axis is zero-padded); candidates
    are scored by effective tile width per step, penalising padding overhead.
    """
    max_t = max(128, min(ti_target, _round_up(I, 128)))
    best_t, best_score = None, -1.0
    t = 128
    while t <= max_t:
        if _vmem_estimate(tm, H, t, w_bytes, x_bytes) <= budget:
            score = t * (I / _round_up(I, t))
            if score > best_score:
                best_t, best_score = t, score
        t += 128
    return best_t if best_t is not None else 128


# ----------------------------------------------------------------------------
# Public wrapper
# ----------------------------------------------------------------------------
@functools.partial(
    jax.jit, static_argnames=("tm_target", "ti_target", "vmem_budget_bytes"))
def qwen2_mlp(hidden_state, gate_w, up_w, down_w, *,
              tm_target=1024, ti_target=2048, vmem_budget_bytes=None):
    """Qwen2 MLP forward.

    hidden_state: (B, S, H)
    gate_w, up_w: (I, H)  -- nn.Linear native (out_features, in_features)
    down_w:       (I, H)  -- pre-transposed (in_features, out_features), so the
                             kernel computes hidden @ down_w directly.

    All matmuls accumulate in f32.  Note: the per-call weight pad / gate|up
    interleave below is cheap relative to weight streaming, but in a real
    serving stack it should be hoisted out of the hot path and cached.
    """
    B, S, H = hidden_state.shape
    I = gate_w.shape[0]
    assert gate_w.shape == (I, H) and up_w.shape == (I, H) and down_w.shape == (I, H)
    M = B * S

    x_bytes = jnp.dtype(hidden_state.dtype).itemsize
    w_bytes = jnp.dtype(gate_w.dtype).itemsize

    # --- generation-aware VMEM budget (trace-time static) -------------------
    vmem_cap = _vmem_capacity_bytes()
    budget = vmem_budget_bytes
    if budget is None:
        # ~52 MiB on v7x (64 MiB VMEM), ~104 MiB on v5e/v6e (128 MiB VMEM).
        budget = min(vmem_cap - (12 << 20), 104 << 20)
    budget = min(int(budget), vmem_cap - (8 << 20))

    # --- M tile: scale with token count, shrink only for feasibility --------
    tm = min(tm_target, _round_up(M, 16))
    while tm > 16 and _vmem_estimate(tm, H, 128, w_bytes, x_bytes) > budget:
        tm = max(16, _round_up(tm // 2, 16))
    # Re-balance so the last M tile isn't mostly padding (also keeps >=2 grid
    # tiles on the "parallel" axis for megacore whenever M spans >1 tile).
    n_i = _cdiv(M, tm)
    tm = _round_up(_cdiv(M, n_i), 16)
    Mp = n_i * tm

    # --- I tile: largest 128-multiple that fits; I is zero-padded to it -----
    tI = _pick_ti(I, H, tm, w_bytes, x_bytes, ti_target, budget)
    Ip = _round_up(I, tI)
    n_j = Ip // tI

    est = _vmem_estimate(tm, H, tI, w_bytes, x_bytes)
    vmem_limit = int(min(max(est + (8 << 20), 32 << 20), vmem_cap - (4 << 20)))

    # --- operand preparation -------------------------------------------------
    x2d = hidden_state.reshape(M, H)
    if Mp != M:
        x2d = jnp.pad(x2d, ((0, Mp - M), (0, 0)))

    if Ip != I:
        pad_i = ((0, Ip - I), (0, 0))
        gate_w = jnp.pad(gate_w, pad_i)
        up_w = jnp.pad(up_w, pad_i)
        down_w = jnp.pad(down_w, pad_i)
    # Interleave gate/up at tI granularity so each grid step streams ONE
    # contiguous (2*tI, H) block: rows [0, tI) = gate tile j, [tI, 2*tI) = up.
    gu_w = jnp.stack([gate_w.reshape(n_j, tI, H),
                      up_w.reshape(n_j, tI, H)], axis=1).reshape(2 * Ip, H)

    grid = (Mp // tm, n_j)

    out2d = pl.pallas_call(
        functools.partial(_qwen2_mlp_kernel, ti=tI),
        out_shape=jax.ShapeDtypeStruct((Mp, H), hidden_state.dtype),
        grid_spec=pltpu.PrefetchScalarGridSpec(
            num_scalar_prefetch=0,
            grid=grid,
            in_specs=[
                pl.BlockSpec((tm, H), lambda i, j: (i, 0)),       # x tile
                pl.BlockSpec((2 * tI, H), lambda i, j: (j, 0)),   # gate|up tile
                pl.BlockSpec((tI, H), lambda i, j: (j, 0)),       # down tile
            ],
            out_specs=pl.BlockSpec((tm, H), lambda i, j: (i, 0)),
            scratch_shapes=[pltpu.VMEM((tm, H), jnp.float32)],    # f32 acc
        ),
        compiler_params=pltpu.CompilerParams(
            dimension_semantics=("parallel", "arbitrary"),
            vmem_limit_bytes=vmem_limit,
        ),
    )(x2d, gu_w, down_w)

    return out2d[:M].reshape(B, S, H)


# ----------------------------------------------------------------------------
# Reference + tests
# ----------------------------------------------------------------------------
def _reference_mlp(hidden_state, gate_w, up_w, down_w):
    B, S, H = hidden_state.shape
    x = hidden_state.reshape(-1, H).astype(jnp.float32)
    g = x @ gate_w.astype(jnp.float32).T
    u = x @ up_w.astype(jnp.float32).T
    out = (jax.nn.silu(g) * u) @ down_w.astype(jnp.float32)
    return out.reshape(B, S, H)


if __name__ == "__main__":
    key = jax.random.PRNGKey(0)

    # ---- test 1: small f32 config ------------------------------------------
    batch, seq, hidden, intermediate = 2, 8, 32, 64
    k_x, k_g, k_u, k_d = jax.random.split(key, 4)
    hidden_state = jax.random.normal(k_x, (batch, seq, hidden), dtype=jnp.float32)
    scale = 0.02
    gate_w = scale * jax.random.normal(k_g, (intermediate, hidden), jnp.float32)
    up_w = scale * jax.random.normal(k_u, (intermediate, hidden), jnp.float32)
    down_w = scale * jax.random.normal(k_d, (intermediate, hidden), jnp.float32)

    out = jax.block_until_ready(qwen2_mlp(hidden_state, gate_w, up_w, down_w))
    ref = _reference_mlp(hidden_state, gate_w, up_w, down_w)
    assert out.shape == (batch, seq, hidden)
    assert jnp.allclose(out, ref, atol=1e-5, rtol=1e-5)

    # ---- test 2: ragged token count (B*S not a multiple of the M tile) ------
    hs_ragged = hidden_state[:, :7, :]                        # M = 14
    out_r = jax.block_until_ready(qwen2_mlp(hs_ragged, gate_w, up_w, down_w))
    ref_r = _reference_mlp(hs_ragged, gate_w, up_w, down_w)
    assert out_r.shape == (batch, 7, hidden)
    assert jnp.allclose(out_r, ref_r, atol=1e-5, rtol=1e-5)

    # ---- test 3: bf16 contract (production dtype), f32 accumulation ---------
    out_bf16 = jax.block_until_ready(
        qwen2_mlp(hidden_state.astype(jnp.bfloat16),
                  gate_w.astype(jnp.bfloat16),
                  up_w.astype(jnp.bfloat16),
                  down_w.astype(jnp.bfloat16)))
    assert out_bf16.dtype == jnp.bfloat16
    assert jnp.allclose(out_bf16.astype(jnp.float32), ref, atol=3e-2, rtol=3e-2)

    print("KERNEL_OK")
</pallas_src>

<mosaic_0001>
module attributes {stable_mosaic.version = 11 : i64} {
  func.func @_qwen2_mlp_kernel(%arg0: i32, %arg1: i32, %arg2: memref<16x32xf32, #tpu.memory_space<vmem>>, %arg3: memref<256x32xf32, #tpu.memory_space<vmem>>, %arg4: memref<128x32xf32, #tpu.memory_space<vmem>>, %arg5: memref<16x32xf32, #tpu.memory_space<vmem>>, %arg6: memref<16x32xf32, #tpu.memory_space<vmem>>) attributes {dimension_semantics = [#tpu.dimension_semantics<parallel>, #tpu.dimension_semantics<arbitrary>], iteration_bounds = array<i64: 1, 1>, scalar_prefetch = 0 : i64, scratch_operands = 1 : i64, tpu.core_type = #tpu.core_type<tc>, window_params = [{transform_indices = @transform_0, window_bounds = array<i64: 16, 32>}, {transform_indices = @transform_1, window_bounds = array<i64: 256, 32>}, {transform_indices = @transform_2, window_bounds = array<i64: 128, 32>}, {transform_indices = @transform_3, window_bounds = array<i64: 16, 32>}]} {
    %c0_i32 = arith.constant 0 : i32
    %0 = arith.cmpi eq, %arg1, %c0_i32 : i32
    %1 = arith.extui %0 : i1 to i32
    %c0_i32_0 = arith.constant 0 : i32
    %2 = arith.cmpi ne, %1, %c0_i32_0 : i32
    scf.if %2 {
      %cst_14 = arith.constant 0.000000e+00 : f32
      %23 = vector.broadcast %cst_14 : f32 to vector<16x32xf32>
      %c0_15 = arith.constant 0 : index
      %c0_16 = arith.constant 0 : index
      %24 = vector.load %arg6[%c0_15, %c0_16] : memref<16x32xf32, #tpu.memory_space<vmem>>, vector<16x32xf32>
      tpu.vector_store %arg6[%c0_15, %c0_16], %23 {strides = array<i32>} : memref<16x32xf32, #tpu.memory_space<vmem>>, vector<16x32xf32>,
    } else {
    }
    %c0 = arith.constant 0 : index
    %c0_1 = arith.constant 0 : index
    %3 = vector.load %arg2[%c0, %c0_1] : memref<16x32xf32, #tpu.memory_space<vmem>>, vector<16x32xf32>
    %c0_2 = arith.constant 0 : index
    %c0_3 = arith.constant 0 : index
    %4 = vector.load %arg3[%c0_2, %c0_3] : memref<256x32xf32, #tpu.memory_space<vmem>>, vector<256x32xf32>
    %cst = arith.constant dense<0.000000e+00> : vector<16x256xf32>
    %5 = tpu.matmul %3, %4, %cst {dimension_numbers = #tpu.dot_dimension_numbers<[1], [1], [0], [0], [0, 0, 1, 0], [], []>} : vector<16x32xf32>, vector<256x32xf32>, vector<16x256xf32> -> vector<16x256xf32>
    %6 = vector.extract_strided_slice %5 {offsets = [0, 0], sizes = [16, 128], strides = [1, 1]} : vector<16x256xf32> to vector<16x128xf32>
    %7 = vector.extract_strided_slice %5 {offsets = [0, 128], sizes = [16, 128], strides = [1, 1]} : vector<16x256xf32> to vector<16x128xf32>
    %8 = arith.negf %6 : vector<16x128xf32>
    %9 = math.exp %8 : vector<16x128xf32>
    %cst_4 = arith.constant 1.000000e+00 : f32
    %10 = vector.broadcast %cst_4 : f32 to vector<16x128xf32>
    %11 = arith.addf %10, %9 : vector<16x128xf32>
    %12 = arith.divf %10, %11 : vector<16x128xf32>
    %13 = arith.mulf %6, %12 : vector<16x128xf32>
    %14 = arith.mulf %13, %7 : vector<16x128xf32>
    %c0_5 = arith.constant 0 : index
    %c0_6 = arith.constant 0 : index
    %15 = vector.load %arg6[%c0_5, %c0_6] : memref<16x32xf32, #tpu.memory_space<vmem>>, vector<16x32xf32>
    %c0_7 = arith.constant 0 : index
    %c0_8 = arith.constant 0 : index
    %16 = vector.load %arg4[%c0_7, %c0_8] : memref<128x32xf32, #tpu.memory_space<vmem>>, vector<128x32xf32>
    %cst_9 = arith.constant dense<0.000000e+00> : vector<16x32xf32>
    %17 = tpu.matmul %14, %16, %cst_9 {dimension_numbers = #tpu.dot_dimension_numbers<[1], [0], [0], [1], [0, 0, 1, 1], [], []>} : vector<16x128xf32>, vector<128x32xf32>, vector<16x32xf32> -> vector<16x32xf32>
    %18 = arith.addf %15, %17 : vector<16x32xf32>
    %c0_10 = arith.constant 0 : index
    %c0_11 = arith.constant 0 : index
    %19 = vector.load %arg6[%c0_10, %c0_11] : memref<16x32xf32, #tpu.memory_space<vmem>>, vector<16x32xf32>
    tpu.vector_store %arg6[%c0_10, %c0_11], %18 {strides = array<i32>} : memref<16x32xf32, #tpu.memory_space<vmem>>, vector<16x32xf32>,
    %c0_i32_12 = arith.constant 0 : i32
    %20 = arith.cmpi eq, %arg1, %c0_i32_12 : i32
    %21 = arith.extui %20 : i1 to i32
    %c0_i32_13 = arith.constant 0 : i32
    %22 = arith.cmpi ne, %21, %c0_i32_13 : i32
    scf.if %22 {
      %c0_14 = arith.constant 0 : index
      %c0_15 = arith.constant 0 : index
      %23 = vector.load %arg6[%c0_14, %c0_15] : memref<16x32xf32, #tpu.memory_space<vmem>>, vector<16x32xf32>
      %c0_16 = arith.constant 0 : index
      %c0_17 = arith.constant 0 : index
      %24 = vector.load %arg5[%c0_16, %c0_17] : memref<16x32xf32, #tpu.memory_space<vmem>>, vector<16x32xf32>
      tpu.vector_store %arg5[%c0_16, %c0_17], %23 {strides = array<i32>} : memref<16x32xf32, #tpu.memory_space<vmem>>, vector<16x32xf32>,
    } else {
    }
    return
  }
  func.func @transform_0(%arg0: i32, %arg1: i32) -> (i32, i32) {
    %c0_i32 = arith.constant 0 : i32
    %c0_i32_0 = arith.constant 0 : i32
    return %arg0, %c0_i32 : i32, i32
  }
  func.func @transform_1(%arg0: i32, %arg1: i32) -> (i32, i32) {
    %c0_i32 = arith.constant 0 : i32
    %c0_i32_0 = arith.constant 0 : i32
    return %arg1, %c0_i32 : i32, i32
  }
  func.func @transform_2(%arg0: i32, %arg1: i32) -> (i32, i32) {
    %c0_i32 = arith.constant 0 : i32
    %c0_i32_0 = arith.constant 0 : i32
    return %arg1, %c0_i32 : i32, i32
  }
  func.func @transform_3(%arg0: i32, %arg1: i32) -> (i32, i32) {
    %c0_i32 = arith.constant 0 : i32
    %c0_i32_0 = arith.constant 0 : i32
    return %arg0, %c0_i32 : i32, i32
  }
}

</mosaic_0001>

<llo_original>
// kernel: qwen2_mlp.1
$region0: #{qwen2_mlp.1}
  #allocation0 [shape = 'u32[]', space=smem, size = 0x4, offset = 0x4, fixed_abs, tag = 'smem constant byte address 0x4 - core index']
  #allocation1 [shape = 'u32[144,128]{1,0:T(1,128)}', space=vmem, size = 0x12000, scoped, tag = 'internal scratch']
  #allocation2 [shape = 'f32[16,32]{1,0:T(8,128)}', space=vmem, size = 0x2000, scoped, tag = 'scratch operand']
  %s0 = inlined_call_operand.vmem [shape: f32[16,32], index: 0, kind: input, shape index: {}]
  %s1 = inlined_call_operand.vmem [shape: f32[256,32], index: 1, kind: input, shape index: {}]
  %s2 = inlined_call_operand.vmem [shape: f32[128,32], index: 2, kind: input, shape index: {}]
  %s3 = inlined_call_operand.hbm [shape: f32[16,32], index: 3, kind: output, shape index: {}]
  %s4 = sld [smem:[#allocation0]]
  $region30: #{qwen2_mlp.1} parent=0
    _
  %s6 = ssub.s32 1, %s4
  %s7 = scalar_select 0, %s6, %s4
  $region1: #{qwen2_mlp.1} parent=0
    #allocation3 [shape = 'u8[8192]{0}', space=vmem, size = 0x2000, scoped, tag = 'output window, operand 0, single buffered']
    #allocation4 [shape = 's32[1]{0}', space=sflag, size = 0x4, scoped, tag = 'scoped memory for qwen2_mlp.1']
    %8 = vsyncpa [#allocation4], 0
    // Predicated region
    $region2: #{qwen2_mlp.1} parent=1 // pred_check
      _
    $region3: #{qwen2_mlp.1} parent=1 // pred_check_branch
      %10 = sbr.rel (0) target = $region5
    $region4: #{qwen2_mlp.1} parent=1 // pred_region
      _
    $region5: #{qwen2_mlp.1} parent=1 // pred_fallthru
      _
    // Predicated region
    $region6: #{qwen2_mlp.1} parent=1 // pred_check
      _
    $region7: #{qwen2_mlp.1} parent=1 // pred_check_branch
      %12 = sbr.rel (0) target = $region9
    $region8: #{qwen2_mlp.1} parent=1 // pred_region
      _
    $region9: #{qwen2_mlp.1} parent=1 // pred_fallthru
      _
    // Predicated region
    $region10: #{qwen2_mlp.1} parent=1 // pred_check
      _
    $region11: #{qwen2_mlp.1} parent=1 // pred_check_branch
      %14 = sbr.rel (0) target = $region13
    $region12: #{qwen2_mlp.1} parent=1 // pred_region
      _
    $region13: #{qwen2_mlp.1} parent=1 // pred_fallthru
      _
    %p15 = scmp.eq.s32.totalorder 0, 0
    // Predicated region
    $region14: #{qwen2_mlp.1} parent=1 // pred_check
      %p16 = pneg %p15
    $region15: #{qwen2_mlp.1} parent=1 // pred_check_branch
      %18 = sbr.rel (%p16) target = $region17
    $region16: #{qwen2_mlp.1} parent=1 // pred_region
      %vm19 = vcmask 261120
      %20 = vst.msk [vmem:[#allocation2] sm:$0xff] %vm19, 0.0
      %21 = vst.msk [vmem:[#allocation2 + $0x8] sm:$0xff] %vm19, 0.0
    $region17: #{qwen2_mlp.1} parent=1 // pred_fallthru
      _
    %v22 = vld [vmem:[%s0] sm:$0xff]
    %v23 = vld [vmem:[%s0 + $0x8] sm:$0xff]
    %v24 = vld [vmem:[%s1] sm:$0xff]
    %v25 = vld [vmem:[%s1 + $0x8] sm:$0xff]
    %v26 = vld [vmem:[%s1 + $0x10] sm:$0xff]
    %v27 = vld [vmem:[%s1 + $0x18] sm:$0xff]
    %v28 = vld [vmem:[%s1 + $0x20] sm:$0xff]
    %v29 = vld [vmem:[%s1 + $0x28] sm:$0xff]
    %v30 = vld [vmem:[%s1 + $0x30] sm:$0xff]
    %v31 = vld [vmem:[%s1 + $0x38] sm:$0xff]
    %v32 = vld [vmem:[%s1 + $0x40] sm:$0xff]
    %v33 = vld [vmem:[%s1 + $0x48] sm:$0xff]
    %v34 = vld [vmem:[%s1 + $0x50] sm:$0xff]
    %v35 = vld [vmem:[%s1 + $0x58] sm:$0xff]
    %v36 = vld [vmem:[%s1 + $0x60] sm:$0xff]
    %v37 = vld [vmem:[%s1 + $0x68] sm:$0xff]
    %v38 = vld [vmem:[%s1 + $0x70] sm:$0xff]
    %v39 = vld [vmem:[%s1 + $0x78] sm:$0xff]
    %v40 = vld [vmem:[%s1 + $0x80] sm:$0xff]
    %v41 = vld [vmem:[%s1 + $0x88] sm:$0xff]
    %v42 = vld [vmem:[%s1 + $0x90] sm:$0xff]
    %v43 = vld [vmem:[%s1 + $0x98] sm:$0xff]
    %v44 = vld [vmem:[%s1 + $0xa0] sm:$0xff]
    %v45 = vld [vmem:[%s1 + $0xa8] sm:$0xff]
    %v46 = vld [vmem:[%s1 + $0xb0] sm:$0xff]
    %v47 = vld [vmem:[%s1 + $0xb8] sm:$0xff]
    %v48 = vld [vmem:[%s1 + $0xc0] sm:$0xff]
    %v49 = vld [vmem:[%s1 + $0xc8] sm:$0xff]
    %v50 = vld [vmem:[%s1 + $0xd0] sm:$0xff]
    %v51 = vld [vmem:[%s1 + $0xd8] sm:$0xff]
    %v52 = vld [vmem:[%s1 + $0xe0] sm:$0xff]
    %v53 = vld [vmem:[%s1 + $0xe8] sm:$0xff]
    %v54 = vld [vmem:[%s1 + $0xf0] sm:$0xff]
    %v55 = vld [vmem:[%s1 + $0xf8] sm:$0xff]
    %vm56 = vcmask 261120
    %v58 = vsel %vm56, %v22, 0
    %v61 = vsel %vm56, %v23, 0
    %v64 = vsel %vm56, %v24, 0
    %v67 = vsel %vm56, %v25, 0
    %v70 = vsel %vm56, %v26, 0
    %v73 = vsel %vm56, %v27, 0
    %v76 = vsel %vm56, %v28, 0
    %v79 = vsel %vm56, %v29, 0
    %v82 = vsel %vm56, %v30, 0
    %v85 = vsel %vm56, %v31, 0
    %v88 = vsel %vm56, %v32, 0
    %v91 = vsel %vm56, %v33, 0
    %v94 = vsel %vm56, %v34, 0
    %v97 = vsel %vm56, %v35, 0
    %v100 = vsel %vm56, %v36, 0
    %v103 = vsel %vm56, %v37, 0
    %v106 = vsel %vm56, %v38, 0
    %v109 = vsel %vm56, %v39, 0
    %v112 = vsel %vm56, %v40, 0
    %v115 = vsel %vm56, %v41, 0
    %v118 = vsel %vm56, %v42, 0
    %v121 = vsel %vm56, %v43, 0
    %v124 = vsel %vm56, %v44, 0
    %v127 = vsel %vm56, %v45, 0
    %v130 = vsel %vm56, %v46, 0
    %v133 = vsel %vm56, %v47, 0
    %v136 = vsel %vm56, %v48, 0
    %v139 = vsel %vm56, %v49, 0
    %v142 = vsel %vm56, %v50, 0
    %v145 = vsel %vm56, %v51, 0
    %v148 = vsel %vm56, %v52, 0
    %v151 = vsel %vm56, %v53, 0
    %v154 = vsel %vm56, %v54, 0
    %v157 = vsel %vm56, %v55, 0
    %159 = vmatprep.subr.mxu0 0.0
    %160 = vmatpush1.xpose.msra.mxu0 %v64
    %161 = vmatprep.subr.mxu0 0.0
    %162 = vmatpush1.xpose.msra.mxu0 %v67
    %163 = vmatprep.subr.mxu0 0.0
    %164 = vmatpush1.xpose.msra.mxu0 %v70
    %165 = vmatprep.subr.mxu0 0.0
    %166 = vmatpush1.xpose.msra.mxu0 %v73
    %167 = vmatprep.subr.mxu0 0.0
    %168 = vmatpush1.xpose.msra.mxu0 %v76
    %169 = vmatprep.subr.mxu0 0.0
    %170 = vmatpush1.xpose.msra.mxu0 %v79
    %171 = vmatprep.subr.mxu0 0.0
    %172 = vmatpush1.xpose.msra.mxu0 %v82
    %173 = vmatprep.subr.mxu0 0.0
    %174 = vmatpush1.xpose.msra.mxu0 %v85
    %175 = vmatprep.subr.mxu0 0.0
    %176 = vmatpush1.xpose.msra.mxu0 %v88
    %177 = vmatprep.subr.mxu0 0.0
    %178 = vmatpush1.xpose.msra.mxu0 %v91
    %179 = vmatprep.subr.mxu0 0.0
    %180 = vmatpush1.xpose.msra.mxu0 %v94
    %181 = vmatprep.subr.mxu0 0.0
    %182 = vmatpush1.xpose.msra.mxu0 %v97
    %183 = vmatprep.subr.mxu0 0.0
    %184 = vmatpush1.xpose.msra.mxu0 %v100
    %185 = vmatprep.subr.mxu0 0.0
    %186 = vmatpush1.xpose.msra.mxu0 %v103
    %187 = vmatprep.subr.mxu0 0.0
    %188 = vmatpush1.xpose.msra.mxu0 %v106
    %189 = vmatprep.subr.mxu0 0.0
    %190 = vmatpush1.xpose.msra.mxu0 %v109
    %191 = vmatprep.subr.mxu0 0.0
    %192 = vmatpush1.xpose.msra.mxu0 %v112
    %193 = vmatprep.subr.mxu0 0.0
    %194 = vmatpush1.xpose.msra.mxu0 %v115
    %195 = vmatprep.subr.mxu0 0.0
    %196 = vmatpush1.xpose.msra.mxu0 %v118
    %197 = vmatprep.subr.mxu0 0.0
    %198 = vmatpush1.xpose.msra.mxu0 %v121
    %199 = vmatprep.subr.mxu0 0.0
    %200 = vmatpush1.xpose.msra.mxu0 %v124
    %201 = vmatprep.subr.mxu0 0.0
    %202 = vmatpush1.xpose.msra.mxu0 %v127
    %203 = vmatprep.subr.mxu0 0.0
    %204 = vmatpush1.xpose.msra.mxu0 %v130
    %205 = vmatprep.subr.mxu0 0.0
    %206 = vmatpush1.xpose.msra.mxu0 %v133
    %207 = vmatprep.subr.mxu0 0.0
    %208 = vmatpush1.xpose.msra.mxu0 %v136
    %209 = vmatprep.subr.mxu0 0.0
    %210 = vmatpush1.xpose.msra.mxu0 %v139
    %211 = vmatprep.subr.mxu0 0.0
    %212 = vmatpush1.xpose.msra.mxu0 %v142
    %213 = vmatprep.subr.mxu0 0.0
    %214 = vmatpush1.xpose.msra.mxu0 %v145
    %215 = vmatprep.subr.mxu0 0.0
    %216 = vmatpush1.xpose.msra.mxu0 %v148
    %217 = vmatprep.subr.mxu0 0.0
    %218 = vmatpush1.xpose.msra.mxu0 %v151
    %219 = vmatprep.subr.mxu0 0.0
    %220 = vmatpush1.xpose.msra.mxu0 %v154
    %221 = vmatprep.subr.mxu0 0.0
    %222 = vmatpush1.xpose.msra.mxu0 %v157
    %223 = vmatprep.mubr.f32.mxu0 0.0
    %224 = vmatmul.mubr.f32.gmra.mrb[0].mxu0 %v58
    %v225 = vpop.f32.mrb[0].mxu0
    %v226 = vadd.f32 0.0, %v225
    %v227 = vpop.f32.mrb[0].mxu0
    %v228 = vadd.f32 0.0, %v227
    %229 = vmatprep.mubr.f32.mxu0 0.0
    %230 = vmatmul.mubr.f32.gmra.mrb[0].mxu0 %v61
    %v231 = vpop.f32.mrb[0].mxu0
    %v232 = vadd.f32 0.0, %v231
    %v233 = vpop.f32.mrb[0].mxu0
    %v234 = vadd.f32 0.0, %v233
    %235 = vdwg.mxu0
    %v236 = vxor.u32 %v226, 2147483648
    %v237 = vxor.u32 %v232, 2147483648
    %v238 = vmul.f32 %v236, 1.442695
    %v239 = vpow.pop %v238
    %v240 = vmul.f32 %v237, 1.442695
    %v241 = vpow.pop %v240
    %v242 = vadd.f32 %v239, 1.0
    %v243 = vadd.f32 %v241, 1.0
    %v244 = vrcp.pop %v242
    %v245 = vmul.f32 1.0, %v244
    %v246 = vrcp.pop %v243
    %v247 = vmul.f32 1.0, %v246
    %v248 = vmul.f32 %v226, %v245
    %v249 = vmul.f32 %v232, %v247
    %v250 = vmul.f32 %v248, %v228
    %v251 = vmul.f32 %v249, %v234
    %v252 = vld [vmem:[#allocation2] sm:$0xff]
    %v253 = vld [vmem:[#allocation2 + $0x8] sm:$0xff]
    %v254 = vld [vmem:[%s2] sm:$0xff]
    %v255 = vld [vmem:[%s2 + $0x8] sm:$0xff]
    %v256 = vld [vmem:[%s2 + $0x10] sm:$0xff]
    %v257 = vld [vmem:[%s2 + $0x18] sm:$0xff]
    %v258 = vld [vmem:[%s2 + $0x20] sm:$0xff]
    %v259 = vld [vmem:[%s2 + $0x28] sm:$0xff]
    %v260 = vld [vmem:[%s2 + $0x30] sm:$0xff]
    %v261 = vld [vmem:[%s2 + $0x38] sm:$0xff]
    %v262 = vld [vmem:[%s2 + $0x40] sm:$0xff]
    %v263 = vld [vmem:[%s2 + $0x48] sm:$0xff]
    %v264 = vld [vmem:[%s2 + $0x50] sm:$0xff]
    %v265 = vld [vmem:[%s2 + $0x58] sm:$0xff]
    %v266 = vld [vmem:[%s2 + $0x60] sm:$0xff]
    %v267 = vld [vmem:[%s2 + $0x68] sm:$0xff]
    %v268 = vld [vmem:[%s2 + $0x70] sm:$0xff]
    %v269 = vld [vmem:[%s2 + $0x78] sm:$0xff]
    %270 = vmatprep.subr.mxu0 0.0
    %271 = vmatpush1.msra.mxu0 %v254
    %272 = vmatprep.subr.mxu0 0.0
    %273 = vmatpush1.msra.mxu0 %v255
    %274 = vmatprep.subr.mxu0 0.0
    %275 = vmatpush1.msra.mxu0 %v256
    %276 = vmatprep.subr.mxu0 0.0
    %277 = vmatpush1.msra.mxu0 %v257
    %278 = vmatprep.subr.mxu0 0.0
    %279 = vmatpush1.msra.mxu0 %v258
    %280 = vmatprep.subr.mxu0 0.0
    %281 = vmatpush1.msra.mxu0 %v259
    %282 = vmatprep.subr.mxu0 0.0
    %283 = vmatpush1.msra.mxu0 %v260
    %284 = vmatprep.subr.mxu0 0.0
    %285 = vmatpush1.msra.mxu0 %v261
    %286 = vmatprep.subr.mxu0 0.0
    %287 = vmatpush1.msra.mxu0 %v262
    %288 = vmatprep.subr.mxu0 0.0
    %289 = vmatpush1.msra.mxu0 %v263
    %290 = vmatprep.subr.mxu0 0.0
    %291 = vmatpush1.msra.mxu0 %v264
    %292 = vmatprep.subr.mxu0 0.0
    %293 = vmatpush1.msra.mxu0 %v265
    %294 = vmatprep.subr.mxu0 0.0
    %295 = vmatpush1.msra.mxu0 %v266
    %296 = vmatprep.subr.mxu0 0.0
    %297 = vmatpush1.msra.mxu0 %v267
    %298 = vmatprep.subr.mxu0 0.0
    %299 = vmatpush1.msra.mxu0 %v268
    %300 = vmatprep.subr.mxu0 0.0
    %301 = vmatpush1.msra.mxu0 %v269
    %302 = vmatprep.subr.mxu0 0.0
    %303 = vmatpush1.msra.mxu0 0.0
    %304 = vmatprep.subr.mxu0 0.0
    %305 = vmatpush1.msra.mxu0 0.0
    %306 = vmatprep.subr.mxu0 0.0
    %307 = vmatpush1.msra.mxu0 0.0
    %308 = vmatprep.subr.mxu0 0.0
    %309 = vmatpush1.msra.mxu0 0.0
    %310 = vmatprep.subr.mxu0 0.0
    %311 = vmatpush1.msra.mxu0 0.0
    %312 = vmatprep.subr.mxu0 0.0
    %313 = vmatpush1.msra.mxu0 0.0
    %314 = vmatprep.subr.mxu0 0.0
    %315 = vmatpush1.msra.mxu0 0.0
    %316 = vmatprep.subr.mxu0 0.0
    %317 = vmatpush1.msra.mxu0 0.0
    %318 = vmatprep.subr.mxu0 0.0
    %319 = vmatpush1.msra.mxu0 0.0
    %320 = vmatprep.subr.mxu0 0.0
    %321 = vmatpush1.msra.mxu0 0.0
    %322 = vmatprep.subr.mxu0 0.0
    %323 = vmatpush1.msra.mxu0 0.0
    %324 = vmatprep.subr.mxu0 0.0
    %325 = vmatpush1.msra.mxu0 0.0
    %326 = vmatprep.subr.mxu0 0.0
    %327 = vmatpush1.msra.mxu0 0.0
    %328 = vmatprep.subr.mxu0 0.0
    %329 = vmatpush1.msra.mxu0 0.0
    %330 = vmatprep.subr.mxu0 0.0
    %331 = vmatpush1.msra.mxu0 0.0
    %332 = vmatprep.subr.mxu0 0.0
    %333 = vmatpush1.msra.mxu0 0.0
    %334 = vmatprep.mubr.f32.mxu0 0.0
    %335 = vmatmul.mubr.f32.gmra.mrb[0].mxu0 %v250
    %v336 = vpop.f32.mrb[0].mxu0
    %v337 = vadd.f32 0.0, %v336
    %v338 = vpop.f32.mrb[0].mxu0
    %339 = vmatprep.mubr.f32.mxu0 0.0
    %340 = vmatmul.mubr.f32.gmra.mrb[0].mxu0 %v251
    %v341 = vpop.f32.mrb[0].mxu0
    %v342 = vadd.f32 0.0, %v341
    %v343 = vpop.f32.mrb[0].mxu0
    %344 = vdwg.mxu0
    %v345 = vadd.f32 %v252, %v337
    %v346 = vadd.f32 %v253, %v342
    %347 = vst.msk [vmem:[#allocation2] sm:$0xff] %vm56, %v345
    %348 = vst.msk [vmem:[#allocation2 + $0x8] sm:$0xff] %vm56, %v346
    // Predicated region
    $region18: #{qwen2_mlp.1} parent=1 // pred_check
      %p349 = pneg %p15
    $region19: #{qwen2_mlp.1} parent=1 // pred_check_branch
      %351 = sbr.rel (%p349) target = $region21
    $region20: #{qwen2_mlp.1} parent=1 // pred_region
      %v352 = vld [vmem:[#allocation2] sm:$0xff]
      %v353 = vld [vmem:[#allocation2 + $0x8] sm:$0xff]
      %354 = vst.msk [vmem:[#allocation3] sm:$0xff] %vm56, %v352
      %355 = vst.msk [vmem:[#allocation3 + $0x8] sm:$0xff] %vm56, %v353
    $region21: #{qwen2_mlp.1} parent=1 // pred_fallthru
      _
    // Predicated region
    $region22: #{qwen2_mlp.1} parent=1 // pred_check
      _
    $region23: #{qwen2_mlp.1} parent=1 // pred_check_branch
      %357 = sbr.rel (0) target = $region25
    $region24: #{qwen2_mlp.1} parent=1 // pred_region
      %s359 = ssub.s32 256, 256
      %360 = vsyncadd [#allocation4], %s359
      %s361 = sshll.u32 [#allocation3], 4
      %s362 = int_to_ptr.vmem [resolvable:$true] %s361
      %367 = dma.vmem_to_hbm [thread:$0]  %s362, 256, %s3, [#allocation4], 128, 128, 8
    $region25: #{qwen2_mlp.1} parent=1 // pred_fallthru
      _
    // Predicated region
    $region26: #{qwen2_mlp.1} parent=1 // pred_check
      _
    $region27: #{qwen2_mlp.1} parent=1 // pred_check_branch
      %369 = sbr.rel (0) target = $region29
    $region28: #{qwen2_mlp.1} parent=1 // pred_region
      %370 = dma.done [#allocation4], 256
    $region29: #{qwen2_mlp.1} parent=1 // pred_fallthru
      _
    %371 = vsyncpa [#allocation4], 1

</llo_original>
